<compile_context>
chip_gen: v7x
topology: tpu7x:2x2x1
jax: 0.10.0
libtpu: 0.0.40
codegen_flags: <defaults>
</compile_context>

<pallas_src>
import functools
import math

import jax
import jax.numpy as jnp
from jax.experimental import pallas as pl
from jax.experimental.pallas import tpu as pltpu


def _round_up(v, m):
    return (v + m - 1) // m * m


def _pad2(a, rows, cols):
    return jnp.pad(a, ((0, rows - a.shape[0]), (0, cols - a.shape[1])))


def _gnn_kernel(x_ref, pe_ref, a_ref, inc_ref,
                w1_ref, b1_ref, w2_ref, b2_ref,
                out_ref, *, eps):
    """One batch block in 'batch-in-lanes' layout.

    x_ref   : (Tp, Bt*D)  f32   term embeddings (batch folded into lanes)
    pe_ref  : (Kp, Bt*D)  bf16  stacked [pred_emb ; inv_pred_emb]
    a_ref   : (Tp, Tp)    bf16  fused incidence*selection matrix
    inc_ref : (Tp, Kp)    bf16  signed incidence [tail | head]
    w1/w2   : (Bt*D,Bt*H)/(Bt*H,Bt*D) bf16 block-diagonal MLP weights
    b1/b2   : (1,Bt*H)/(1,Bt*D) f32 lane-tiled biases
    """
    x = x_ref[...]                                   # (Tp, Bt*D) f32
    x_bf = x.astype(jnp.bfloat16)                    # single rounding of x

    # Fused message passing + signed sum-aggregation: two lane-dense 2-D MXU
    # matmuls with f32 accumulation; the eps-residual stays f32 on the VPU.
    agg = (jnp.dot(a_ref[...], x_bf, preferred_element_type=jnp.float32)
           + jnp.dot(inc_ref[...], pe_ref[...],
                     preferred_element_type=jnp.float32)
           + eps * x)                                # (Tp, Bt*D) f32

    # MLP (layers=1): Linear(D->H) -> ReLU -> Linear(H->D) applied per
    # (batch, term) vector via block-diagonal weights, so the batch stays in
    # the lane dimension and no in-kernel relayout/reshape is needed.
    h1 = jnp.maximum(
        jnp.dot(agg.astype(jnp.bfloat16), w1_ref[...],
                preferred_element_type=jnp.float32) + b1_ref[...], 0.0)
    y = (jnp.dot(h1.astype(jnp.bfloat16), w2_ref[...],
                 preferred_element_type=jnp.float32) + b2_ref[...])
    out_ref[...] = y.astype(out_ref.dtype)           # lane-dense unmasked store


def logical_gnn_layer(term_emb, pred_emb, inv_pred_emb,
                      head_sel, tail_sel, inc_head, inc_tail,
                      w1, b1, w2, b2, *, eps=0.1, block_b=None):
    """term_emb: (B,T,D); pred_emb/inv_pred_emb: (B,P,D); returns (B,T,D) f32."""
    B, T, D = term_emb.shape
    P = pred_emb.shape[1]
    H = w1.shape[1]
    f32, bf16 = jnp.float32, jnp.bfloat16

    # ---- batch block size: fold Bt batch elements into the lane axis --------
    # Bt*D is a multiple of 128 (lane-dense matmuls / unmasked stores) while
    # keeping >= 2 grid steps so both v7x TensorCores get work.  On v5e/v6e a
    # larger block_b (more work per step) can be passed explicitly.
    if block_b is None:
        base = 128 // math.gcd(D, 128)               # smallest Bt with Bt*D % 128 == 0
        block_b = max(base, base * max(1, B // (2 * base)))
    Bt = block_b
    Bp = _round_up(B, Bt)
    steps = Bp // Bt

    Tp = _round_up(T, 8)                              # cheap sublane padding only
    Kp = _round_up(2 * P, 8)
    bd, bh = Bt * D, Bt * H

    # ---- activations -> (T, B*D) "batch-in-lanes" layout, no feature padding
    # TODO(synk): in a multi-layer reasoner keep this layout across layers to
    # avoid the per-call transpose/reshape on the HBM side.
    x2 = jnp.transpose(term_emb.astype(f32), (1, 0, 2)).reshape(T, B * D)
    pe2 = (jnp.transpose(jnp.concatenate([pred_emb, inv_pred_emb], axis=1),
                         (1, 0, 2))
           .reshape(2 * P, B * D).astype(bf16))
    x2 = _pad2(x2, Tp, Bp * D)
    pe2 = _pad2(pe2, Kp, Bp * D)

    # ---- fused static structure (gather composed with signed scatter) -------
    a_mat = _pad2((inc_tail @ head_sel + inc_head @ tail_sel), Tp, Tp).astype(bf16)
    inc_cat = _pad2(jnp.concatenate([inc_tail, inc_head], axis=1), Tp, Kp).astype(bf16)

    # ---- block-diagonal MLP weights (batch stays in lanes inside the kernel)
    eye = jnp.eye(Bt, dtype=f32)
    w1b = jnp.kron(eye, w1.astype(f32)).astype(bf16)          # (Bt*D, Bt*H)
    w2b = jnp.kron(eye, w2.astype(f32)).astype(bf16)          # (Bt*H, Bt*D)
    b1b = jnp.tile(b1.reshape(1, H).astype(f32), (1, Bt))     # (1, Bt*H)
    b2b = jnp.tile(b2.reshape(1, D).astype(f32), (1, Bt))     # (1, Bt*D)

    # ---- advisory scheduling hint (actual MXU flops / HBM bytes) ------------
    flops = steps * (2 * Tp * Tp * bd + 2 * Tp * Kp * bd + 4 * Tp * bd * bh)
    bytes_accessed = (Tp * Bp * D * 4            # x in (f32)
                      + Kp * Bp * D * 2          # stacked preds (bf16)
                      + Tp * Bp * D * 4          # out (f32)
                      + Tp * Tp * 2 + Tp * Kp * 2
                      + 2 * bd * bh * 2          # block-diag W1, W2 (bf16)
                      + (bh + bd) * 4)           # biases (f32)

    out2 = pl.pallas_call(
        functools.partial(_gnn_kernel, eps=eps),
        out_shape=jax.ShapeDtypeStruct((Tp, Bp * D), jnp.float32),
        grid_spec=pltpu.PrefetchScalarGridSpec(
            num_scalar_prefetch=0,
            grid=(steps,),
            in_specs=[
                pl.BlockSpec((Tp, bd), lambda b: (0, b)),     # term emb block
                pl.BlockSpec((Kp, bd), lambda b: (0, b)),     # [pred ; inv_pred] block
                pl.BlockSpec((Tp, Tp), lambda b: (0, 0)),     # fused structure A
                pl.BlockSpec((Tp, Kp), lambda b: (0, 0)),     # signed incidence
                pl.BlockSpec((bd, bh), lambda b: (0, 0)),     # W1 (block-diag)
                pl.BlockSpec((1, bh), lambda b: (0, 0)),      # b1
                pl.BlockSpec((bh, bd), lambda b: (0, 0)),     # W2 (block-diag)
                pl.BlockSpec((1, bd), lambda b: (0, 0)),      # b2
            ],
            out_specs=pl.BlockSpec((Tp, bd), lambda b: (0, b)),
        ),
        compiler_params=pltpu.CompilerParams(
            dimension_semantics=("parallel",),
            vmem_limit_bytes=32 * 1024 * 1024),
        cost_estimate=pl.CostEstimate(flops=int(flops), transcendentals=0,
                                      bytes_accessed=int(bytes_accessed)),
    )(x2, pe2, a_mat, inc_cat, w1b, b1b, w2b, b2b)

    # back to the module's (B, T, D) layout; padded term rows / batch cols drop.
    out = jnp.transpose(out2[:T, :B * D].reshape(T, B, D), (1, 0, 2))
    return out


def _reference(term_emb, pred_emb, inv_pred_emb, edges, w1, b1, w2, b2, eps):
    """Pure-JAX (f32) mirror of the PyTorch dict/loop forward (agg_func='sum')."""
    B, T, D = term_emb.shape
    collect = {t: [] for t in range(T)}
    for p, (h, t, s) in enumerate(edges):
        collect[t].append(s * (term_emb[:, h, :] + pred_emb[:, p, :]))
        collect[h].append(s * (term_emb[:, t, :] + inv_pred_emb[:, p, :]))
    outs = []
    for t in range(T):
        agg = sum(collect[t]) + eps * term_emb[:, t, :]
        h1 = jnp.maximum(agg @ w1 + b1, 0.0)
        outs.append(h1 @ w2 + b2)
    return jnp.stack(outs, axis=1)


if __name__ == "__main__":
    key = jax.random.PRNGKey(0)
    B, T, P = 8, 5, 6          # batch, #terms, #predicates (edges)
    D, H = 32, 32              # feature_dim, hidden_dim
    NUM_ENTITIES = 16
    EPS = 0.1

    ks = jax.random.split(key, 10)

    # ---- deterministic parameter init (shapes from __init__) -----------------
    entity_embedding = jax.random.normal(ks[0], (NUM_ENTITIES, D), jnp.float32) * 0.1
    existential_embedding = jax.random.uniform(ks[1], (1, D), jnp.float32)
    universal_embedding = jax.random.uniform(ks[2], (1, D), jnp.float32)
    free_embedding = jax.random.uniform(ks[3], (1, D), jnp.float32)
    w1 = jax.random.normal(ks[4], (D, H), jnp.float32) * 0.1
    b1 = jax.random.normal(ks[5], (1, H), jnp.float32) * 0.1
    w2 = jax.random.normal(ks[6], (H, D), jnp.float32) * 0.1
    b2 = jax.random.normal(ks[7], (1, D), jnp.float32) * 0.1

    # ---- query graph: (head term, tail term, sign=-1 if skolem_negation) -----
    edges = [(0, 1, 1.0), (1, 2, 1.0), (2, 3, -1.0),
             (3, 4, 1.0), (0, 4, 1.0), (4, 2, -1.0)]

    # ---- initial term embeddings (B, T, D): constants + variable symbols -----
    term_emb = jnp.stack([
        jnp.broadcast_to(entity_embedding[3], (B, D)),        # constant term 0
        jnp.broadcast_to(entity_embedding[7], (B, D)),        # constant term 1
        jnp.broadcast_to(existential_embedding[0], (B, D)),   # existential var
        jnp.broadcast_to(free_embedding[0], (B, D)),          # free var
        jnp.broadcast_to(universal_embedding[0], (B, D)),     # universal var
    ], axis=1)                                                 # (B, T, D)

    # TODO(synk): nbp.estimate_tail_emb is abstract in the reference module; the
    # canonical TransE-style translation (head + relation) is what the kernel
    # and reference implement.
    pred_emb = jax.random.normal(ks[8], (B, P, D), jnp.float32) * 0.1
    inv_pred_emb = jax.random.normal(ks[9], (B, P, D), jnp.float32) * 0.1

    # ---- static structure matrices (glue for the dict/loop graph) ------------
    head_sel = jnp.zeros((P, T), jnp.float32)
    tail_sel = jnp.zeros((P, T), jnp.float32)
    inc_head = jnp.zeros((T, P), jnp.float32)   # collects inverse-pred messages at head
    inc_tail = jnp.zeros((T, P), jnp.float32)   # collects pred messages at tail
    for p, (h, t, s) in enumerate(edges):
        head_sel = head_sel.at[p, h].set(1.0)
        tail_sel = tail_sel.at[p, t].set(1.0)
        inc_tail = inc_tail.at[t, p].set(s)
        inc_head = inc_head.at[h, p].set(s)

    # ---- run Pallas kernel (block_b auto -> Bt=4, grid=2 for B=8, D=32) ------
    out = logical_gnn_layer(term_emb, pred_emb, inv_pred_emb,
                            head_sel, tail_sel, inc_head, inc_tail,
                            w1, b1, w2, b2, eps=EPS)
    out = jax.block_until_ready(out)

    # ---- correctness check against loop-based f32 reference ------------------
    # (tolerance loosened vs pure f32 because matmuls run in bf16 on the MXU)
    ref = _reference(term_emb, pred_emb, inv_pred_emb, edges, w1, b1, w2, b2, EPS)
    assert out.shape == (B, T, D)
    assert jnp.allclose(out, ref, atol=5e-2, rtol=5e-2), "kernel mismatch vs reference"

    print("KERNEL_OK")
</pallas_src>

<mosaic_0001>
module attributes {stable_mosaic.version = 11 : i64} {
  func.func @_gnn_kernel(%arg0: i32, %arg1: memref<8x128xf32, #tpu.memory_space<vmem>>, %arg2: memref<16x128xbf16, #tpu.memory_space<vmem>>, %arg3: memref<8x8xbf16, #tpu.memory_space<vmem>>, %arg4: memref<8x16xbf16, #tpu.memory_space<vmem>>, %arg5: memref<128x128xbf16, #tpu.memory_space<vmem>>, %arg6: memref<1x128xf32, #tpu.memory_space<vmem>>, %arg7: memref<128x128xbf16, #tpu.memory_space<vmem>>, %arg8: memref<1x128xf32, #tpu.memory_space<vmem>>, %arg9: memref<8x128xf32, #tpu.memory_space<vmem>>) attributes {dimension_semantics = [#tpu.dimension_semantics<parallel>], iteration_bounds = array<i64: 2>, scalar_prefetch = 0 : i64, scratch_operands = 0 : i64, tpu.core_type = #tpu.core_type<tc>, window_params = [{transform_indices = @transform_0, window_bounds = array<i64: 8, 128>}, {transform_indices = @transform_1, window_bounds = array<i64: 16, 128>}, {pipeline_mode = #tpu.pipeline_mode<synchronous>, transform_indices = @transform_2, window_bounds = array<i64: 8, 8>}, {pipeline_mode = #tpu.pipeline_mode<synchronous>, transform_indices = @transform_3, window_bounds = array<i64: 8, 16>}, {pipeline_mode = #tpu.pipeline_mode<synchronous>, transform_indices = @transform_4, window_bounds = array<i64: 128, 128>}, {pipeline_mode = #tpu.pipeline_mode<synchronous>, transform_indices = @transform_5, window_bounds = array<i64: 1, 128>}, {pipeline_mode = #tpu.pipeline_mode<synchronous>, transform_indices = @transform_6, window_bounds = array<i64: 128, 128>}, {pipeline_mode = #tpu.pipeline_mode<synchronous>, transform_indices = @transform_7, window_bounds = array<i64: 1, 128>}, {transform_indices = @transform_8, window_bounds = array<i64: 8, 128>}]} {
    %c0 = arith.constant 0 : index
    %c0_0 = arith.constant 0 : index
    %0 = vector.load %arg1[%c0, %c0_0] : memref<8x128xf32, #tpu.memory_space<vmem>>, vector<8x128xf32>
    %1 = arith.truncf %0 : vector<8x128xf32> to vector<8x128xbf16>
    %c0_1 = arith.constant 0 : index
    %c0_2 = arith.constant 0 : index
    %2 = vector.load %arg3[%c0_1, %c0_2] : memref<8x8xbf16, #tpu.memory_space<vmem>>, vector<8x8xbf16>
    %cst = arith.constant dense<0.000000e+00> : vector<8x128xf32>
    %3 = tpu.matmul %2, %1, %cst {dimension_numbers = #tpu.dot_dimension_numbers<[1], [0], [0], [1], [0, 0, 1, 1], [], []>} : vector<8x8xbf16>, vector<8x128xbf16>, vector<8x128xf32> -> vector<8x128xf32>
    %c0_3 = arith.constant 0 : index
    %c0_4 = arith.constant 0 : index
    %4 = vector.load %arg4[%c0_3, %c0_4] : memref<8x16xbf16, #tpu.memory_space<vmem>>, vector<8x16xbf16>
    %c0_5 = arith.constant 0 : index
    %c0_6 = arith.constant 0 : index
    %5 = vector.load %arg2[%c0_5, %c0_6] : memref<16x128xbf16, #tpu.memory_space<vmem>>, vector<16x128xbf16>
    %cst_7 = arith.constant dense<0.000000e+00> : vector<8x128xf32>
    %6 = tpu.matmul %4, %5, %cst_7 {dimension_numbers = #tpu.dot_dimension_numbers<[1], [0], [0], [1], [0, 0, 1, 1], [], []>} : vector<8x16xbf16>, vector<16x128xbf16>, vector<8x128xf32> -> vector<8x128xf32>
    %7 = arith.addf %3, %6 : vector<8x128xf32>
    %cst_8 = arith.constant 1.000000e-01 : f32
    %8 = vector.broadcast %cst_8 : f32 to vector<8x128xf32>
    %9 = arith.mulf %8, %0 : vector<8x128xf32>
    %10 = arith.addf %7, %9 : vector<8x128xf32>
    %11 = arith.truncf %10 : vector<8x128xf32> to vector<8x128xbf16>
    %c0_9 = arith.constant 0 : index
    %c0_10 = arith.constant 0 : index
    %12 = vector.load %arg5[%c0_9, %c0_10] : memref<128x128xbf16, #tpu.memory_space<vmem>>, vector<128x128xbf16>
    %cst_11 = arith.constant dense<0.000000e+00> : vector<8x128xf32>
    %13 = tpu.matmul %11, %12, %cst_11 {dimension_numbers = #tpu.dot_dimension_numbers<[1], [0], [0], [1], [0, 0, 1, 1], [], []>} : vector<8x128xbf16>, vector<128x128xbf16>, vector<8x128xf32> -> vector<8x128xf32>
    %c0_12 = arith.constant 0 : index
    %c0_13 = arith.constant 0 : index
    %14 = vector.load %arg6[%c0_12, %c0_13] : memref<1x128xf32, #tpu.memory_space<vmem>>, vector<1x128xf32>
    %15 = vector.broadcast %14 : vector<1x128xf32> to vector<8x128xf32>
    %16 = arith.addf %13, %15 : vector<8x128xf32>
    %cst_14 = arith.constant 0.000000e+00 : f32
    %17 = vector.broadcast %cst_14 : f32 to vector<8x128xf32>
    %18 = arith.maximumf %16, %17 : vector<8x128xf32>
    %19 = arith.truncf %18 : vector<8x128xf32> to vector<8x128xbf16>
    %c0_15 = arith.constant 0 : index
    %c0_16 = arith.constant 0 : index
    %20 = vector.load %arg7[%c0_15, %c0_16] : memref<128x128xbf16, #tpu.memory_space<vmem>>, vector<128x128xbf16>
    %cst_17 = arith.constant dense<0.000000e+00> : vector<8x128xf32>
    %21 = tpu.matmul %19, %20, %cst_17 {dimension_numbers = #tpu.dot_dimension_numbers<[1], [0], [0], [1], [0, 0, 1, 1], [], []>} : vector<8x128xbf16>, vector<128x128xbf16>, vector<8x128xf32> -> vector<8x128xf32>
    %c0_18 = arith.constant 0 : index
    %c0_19 = arith.constant 0 : index
    %22 = vector.load %arg8[%c0_18, %c0_19] : memref<1x128xf32, #tpu.memory_space<vmem>>, vector<1x128xf32>
    %23 = vector.broadcast %22 : vector<1x128xf32> to vector<8x128xf32>
    %24 = arith.addf %21, %23 : vector<8x128xf32>
    %c0_20 = arith.constant 0 : index
    %c0_21 = arith.constant 0 : index
    %25 = vector.load %arg9[%c0_20, %c0_21] : memref<8x128xf32, #tpu.memory_space<vmem>>, vector<8x128xf32>
    tpu.vector_store %arg9[%c0_20, %c0_21], %24 {strides = array<i32>} : memref<8x128xf32, #tpu.memory_space<vmem>>, vector<8x128xf32>,
    return
  }
  func.func @transform_0(%arg0: i32) -> (i32, i32) {
    %c0_i32 = arith.constant 0 : i32
    %c0_i32_0 = arith.constant 0 : i32
    return %c0_i32, %arg0 : i32, i32
  }
  func.func @transform_1(%arg0: i32) -> (i32, i32) {
    %c0_i32 = arith.constant 0 : i32
    %c0_i32_0 = arith.constant 0 : i32
    return %c0_i32, %arg0 : i32, i32
  }
  func.func @transform_2(%arg0: i32) -> (i32, i32) {
    %c0_i32 = arith.constant 0 : i32
    %c0_i32_0 = arith.constant 0 : i32
    %c0_i32_1 = arith.constant 0 : i32
    return %c0_i32, %c0_i32_0 : i32, i32
  }
  func.func @transform_3(%arg0: i32) -> (i32, i32) {
    %c0_i32 = arith.constant 0 : i32
    %c0_i32_0 = arith.constant 0 : i32
    %c0_i32_1 = arith.constant 0 : i32
    return %c0_i32, %c0_i32_0 : i32, i32
  }
  func.func @transform_4(%arg0: i32) -> (i32, i32) {
    %c0_i32 = arith.constant 0 : i32
    %c0_i32_0 = arith.constant 0 : i32
    %c0_i32_1 = arith.constant 0 : i32
    return %c0_i32, %c0_i32_0 : i32, i32
  }
  func.func @transform_5(%arg0: i32) -> (i32, i32) {
    %c0_i32 = arith.constant 0 : i32
    %c0_i32_0 = arith.constant 0 : i32
    %c0_i32_1 = arith.constant 0 : i32
    return %c0_i32, %c0_i32_0 : i32, i32
  }
  func.func @transform_6(%arg0: i32) -> (i32, i32) {
    %c0_i32 = arith.constant 0 : i32
    %c0_i32_0 = arith.constant 0 : i32
    %c0_i32_1 = arith.constant 0 : i32
    return %c0_i32, %c0_i32_0 : i32, i32
  }
  func.func @transform_7(%arg0: i32) -> (i32, i32) {
    %c0_i32 = arith.constant 0 : i32
    %c0_i32_0 = arith.constant 0 : i32
    %c0_i32_1 = arith.constant 0 : i32
    return %c0_i32, %c0_i32_0 : i32, i32
  }
  func.func @transform_8(%arg0: i32) -> (i32, i32) {
    %c0_i32 = arith.constant 0 : i32
    %c0_i32_0 = arith.constant 0 : i32
    return %c0_i32, %arg0 : i32, i32
  }
}

</mosaic_0001>

<llo_original>
// kernel: tpu_custom_call.1
$region0: #{tpu_custom_call.1}
  #allocation0 [shape = 'u32[]', space=smem, size = 0x4, offset = 0x4, fixed_abs, tag = 'smem constant byte address 0x4 - core index']
  #allocation1 [shape = 'u32[144,128]{1,0:T(1,128)}', space=vmem, size = 0x12000, scoped, tag = 'internal scratch']
  %s0 = inlined_call_operand.hbm [shape: f32[8,256], index: 0, kind: input, shape index: {}]
  %s1 = inlined_call_operand.hbm [shape: bf16[16,256], index: 1, kind: input, shape index: {}]
  %s2 = inlined_call_operand.vmem [shape: bf16[8,8], index: 2, kind: input, shape index: {}]
  %s3 = inlined_call_operand.vmem [shape: bf16[8,16], index: 3, kind: input, shape index: {}]
  %s4 = inlined_call_operand.hbm [shape: bf16[128,128], index: 4, kind: input, shape index: {}]
  %s5 = inlined_call_operand.vmem [shape: f32[1,128], index: 5, kind: input, shape index: {}]
  %s6 = inlined_call_operand.hbm [shape: bf16[128,128], index: 6, kind: input, shape index: {}]
  %s7 = inlined_call_operand.vmem [shape: f32[1,128], index: 7, kind: input, shape index: {}]
  %s8 = inlined_call_operand.hbm [shape: f32[8,256], index: 8, kind: output, shape index: {}]
  %s9 = sld [smem:[#allocation0]]
  $region81: #{tpu_custom_call.1} parent=0
    _
  %s11 = ssub.s32 1, %s9
  %s12 = scalar_select 0, %s11, %s9
  $region1: #{tpu_custom_call.1} parent=0
    #allocation2 [shape = 'u8[8192]{0}', space=vmem, size = 0x2000, scoped, tag = 'input window, operand 0']
    #allocation3 [shape = 's32[2]{0}', space=sflag, size = 0x8, scoped, tag = 'scoped memory for tpu_custom_call.1']
    #allocation4 [shape = 's32[2]{0}', space=sflag, size = 0x8, scoped, tag = 'scoped memory for tpu_custom_call.1']
    #allocation5 [shape = 'u8[8192]{0}', space=vmem, size = 0x2000, scoped, tag = 'input window, operand 1']
    #allocation6 [shape = 's32[2]{0}', space=sflag, size = 0x8, scoped, tag = 'scoped memory for tpu_custom_call.1']
    #allocation7 [shape = 'u8[32768]{0}', space=vmem, size = 0x8000, scoped, tag = 'input window, operand 4, single buffered']
    #allocation8 [shape = 'u8[32768]{0}', space=vmem, size = 0x8000, scoped, tag = 'input window, operand 6, single buffered']
    #allocation9 [shape = 's32[1]{0}', space=sflag, size = 0x4, scoped, tag = 'scoped memory for tpu_custom_call.1']
    #allocation10 [shape = 'u8[8192]{0}', space=vmem, size = 0x2000, scoped, tag = 'output window, operand 0']
    %13 = vsyncpa [#allocation3], 0
    %s14 = scalar_lea.sflag [#allocation3], 1
    %15 = vsyncpa %s14, 0
    %16 = vsyncpa [#allocation6], 0
    %s17 = scalar_lea.sflag [#allocation6], 1
    %18 = vsyncpa %s17, 0
    %19 = vsyncpa [#allocation9], 0
    %20 = vsyncpa [#allocation4], 0
    %s21 = scalar_lea.sflag [#allocation4], 1
    %22 = vsyncpa %s21, 0
    loop: start=0, step=1, limit=4
    $region2: #{tpu_custom_call.1} parent=1 // loop_pre_header
      _
    $region3: #{tpu_custom_call.1} parent=1 // loop_header
      %s24 = sphi 0, %s28
      %p25 = scmp.ge.s32.totalorder %s24, 4
      %s34 = sphi 0, %s36
      %s37 = sphi 0, %s34
      %s38 = sphi 0, %s37
      %s54 = sphi 0, %s38
      %s60 = sphi 0, %s62
      %s63 = sphi 0, %s60
      %s64 = sphi 0, %s63
      %s80 = sphi 0, %s64
      %s84 = sphi 0, %s84
      %s86 = sphi 0, %s84
      %s87 = sphi 0, %s86
      %s101 = sphi 0, %s87
      %s105 = sphi 0, %s105
      %s107 = sphi 0, %s105
      %s108 = sphi 0, %s107
      %s122 = sphi 0, %s108
      %s126 = sphi 0, %s126
      %s128 = sphi 0, %s126
      %s129 = sphi 0, %s128
      %s143 = sphi 0, %s129
      %s147 = sphi 0, %s147
      %s149 = sphi 0, %s147
      %s150 = sphi 0, %s149
      %s164 = sphi 0, %s150
      %s168 = sphi 0, %s168
      %s170 = sphi 0, %s168
      %s171 = sphi 0, %s170
      %s185 = sphi 0, %s171
      %s189 = sphi 0, %s189
      %s191 = sphi 0, %s189
      %s192 = sphi 0, %s191
      %s206 = sphi 0, %s192
      %s212 = sphi 0, %s214
      %s215 = sphi 0, %s212
      %s216 = sphi 0, %s215
      %s232 = sphi 0, %s216
    $region4: #{tpu_custom_call.1} parent=1 // loop_header_branch
      %27 = sbr.rel (%p25) target = $region8
    $region5: #{tpu_custom_call.1} parent=1 // loop_body
      %s29 = ssub.s32 %s24, 1
      %s30 = ssub.s32 %s24, 2
      %s31 = sadd.s32 %s24, 1
      %s32 = ssub.s32 %s24, %s31
      %p33 = scmp.eq.s32.totalorder %s32, 0
      %s35 = sadd.s32 %s34, 1
      %s36 = scalar_select %p33, %s34, %s35
      %p39 = pneg %p33
      %p40 = scmp.eq.s32.totalorder %s24, 1
      %p41 = por %p39, %p40
      %p42 = scmp.ne.s32.totalorder %s34, %s37
      %p43 = scmp.eq.s32.totalorder %s24, 0
      %p44 = por %p42, %p43
      %p45 = scmp.ne.s32.totalorder %s34, %s37
      %p46 = scmp.eq.s32.totalorder %s29, 1
      %p47 = por %p45, %p46
      %p48 = scmp.ne.s32.totalorder %s37, %s38
      %p49 = scmp.eq.s32.totalorder %s29, 0
      %p50 = por %p48, %p49
      %p51 = scmp.ne.s32.totalorder %s37, %s38
      %p52 = scmp.eq.s32.totalorder %s30, 1
      %p53 = por %p51, %p52
      %p55 = scmp.ne.s32.totalorder %s38, %s54
      %p56 = scmp.eq.s32.totalorder %s30, 0
      %p57 = por %p55, %p56
      %s58 = ssub.s32 %s24, %s31
      %p59 = scmp.eq.s32.totalorder %s58, 0
      %s61 = sadd.s32 %s60, 1
      %s62 = scalar_select %p59, %s60, %s61
      %p65 = pneg %p59
      %p66 = scmp.eq.s32.totalorder %s24, 1
      %p67 = por %p65, %p66
      %p68 = scmp.ne.s32.totalorder %s60, %s63
      %p69 = scmp.eq.s32.totalorder %s24, 0
      %p70 = por %p68, %p69
      %p71 = scmp.ne.s32.totalorder %s60, %s63
      %p72 = scmp.eq.s32.totalorder %s29, 1
      %p73 = por %p71, %p72
      %p74 = scmp.ne.s32.totalorder %s63, %s64
      %p75 = scmp.eq.s32.totalorder %s29, 0
      %p76 = por %p74, %p75
      %p77 = scmp.ne.s32.totalorder %s63, %s64
      %p78 = scmp.eq.s32.totalorder %s30, 1
      %p79 = por %p77, %p78
      %p81 = scmp.ne.s32.totalorder %s64, %s80
      %p82 = scmp.eq.s32.totalorder %s30, 0
      %p83 = por %p81, %p82
      %s85 = sadd.s32 %s84, 1
      %p88 = scmp.eq.s32.totalorder %s24, 1
      %p89 = scmp.ne.s32.totalorder %s84, %s86
      %p90 = scmp.eq.s32.totalorder %s24, 0
      %p91 = por %p89, %p90
      %p92 = scmp.ne.s32.totalorder %s84, %s86
      %p93 = scmp.eq.s32.totalorder %s29, 1
      %p94 = por %p92, %p93
      %p95 = scmp.ne.s32.totalorder %s86, %s87
      %p96 = scmp.eq.s32.totalorder %s29, 0
      %p97 = por %p95, %p96
      %p98 = scmp.ne.s32.totalorder %s86, %s87
      %p99 = scmp.eq.s32.totalorder %s30, 1
      %p100 = por %p98, %p99
      %p102 = scmp.ne.s32.totalorder %s87, %s101
      %p103 = scmp.eq.s32.totalorder %s30, 0
      %p104 = por %p102, %p103
      %s106 = sadd.s32 %s105, 1
      %p109 = scmp.eq.s32.totalorder %s24, 1
      %p110 = scmp.ne.s32.totalorder %s105, %s107
      %p111 = scmp.eq.s32.totalorder %s24, 0
      %p112 = por %p110, %p111
      %p113 = scmp.ne.s32.totalorder %s105, %s107
      %p114 = scmp.eq.s32.totalorder %s29, 1
      %p115 = por %p113, %p114
      %p116 = scmp.ne.s32.totalorder %s107, %s108
      %p117 = scmp.eq.s32.totalorder %s29, 0
      %p118 = por %p116, %p117
      %p119 = scmp.ne.s32.totalorder %s107, %s108
      %p120 = scmp.eq.s32.totalorder %s30, 1
      %p121 = por %p119, %p120
      %p123 = scmp.ne.s32.totalorder %s108, %s122
      %p124 = scmp.eq.s32.totalorder %s30, 0
      %p125 = por %p123, %p124
      %s127 = sadd.s32 %s126, 1
      %p130 = scmp.eq.s32.totalorder %s24, 1
      %p131 = scmp.ne.s32.totalorder %s126, %s128
      %p132 = scmp.eq.s32.totalorder %s24, 0
      %p133 = por %p131, %p132
      %p134 = scmp.ne.s32.totalorder %s126, %s128
      %p135 = scmp.eq.s32.totalorder %s29, 1
      %p136 = por %p134, %p135
      %p137 = scmp.ne.s32.totalorder %s128, %s129
      %p138 = scmp.eq.s32.totalorder %s29, 0
      %p139 = por %p137, %p138
      %p140 = scmp.ne.s32.totalorder %s128, %s129
      %p141 = scmp.eq.s32.totalorder %s30, 1
      %p142 = por %p140, %p141
      %p144 = scmp.ne.s32.totalorder %s129, %s143
      %p145 = scmp.eq.s32.totalorder %s30, 0
      %p146 = por %p144, %p145
      %s148 = sadd.s32 %s147, 1
      %p151 = scmp.eq.s32.totalorder %s24, 1
      %p152 = scmp.ne.s32.totalorder %s147, %s149
      %p153 = scmp.eq.s32.totalorder %s24, 0
      %p154 = por %p152, %p153
      %p155 = scmp.ne.s32.totalorder %s147, %s149
      %p156 = scmp.eq.s32.totalorder %s29, 1
      %p157 = por %p155, %p156
      %p158 = scmp.ne.s32.totalorder %s149, %s150
      %p159 = scmp.eq.s32.totalorder %s29, 0
      %p160 = por %p158, %p159
      %p161 = scmp.ne.s32.totalorder %s149, %s150
      %p162 = scmp.eq.s32.totalorder %s30, 1
      %p163 = por %p161, %p162
      %p165 = scmp.ne.s32.totalorder %s150, %s164
      %p166 = scmp.eq.s32.totalorder %s30, 0
      %p167 = por %p165, %p166
      %s169 = sadd.s32 %s168, 1
      %p172 = scmp.eq.s32.totalorder %s24, 1
      %p173 = scmp.ne.s32.totalorder %s168, %s170
      %p174 = scmp.eq.s32.totalorder %s24, 0
      %p175 = por %p173, %p174
      %p176 = scmp.ne.s32.totalorder %s168, %s170
      %p177 = scmp.eq.s32.totalorder %s29, 1
      %p178 = por %p176, %p177
      %p179 = scmp.ne.s32.totalorder %s170, %s171
      %p180 = scmp.eq.s32.totalorder %s29, 0
      %p181 = por %p179, %p180
      %p182 = scmp.ne.s32.totalorder %s170, %s171
      %p183 = scmp.eq.s32.totalorder %s30, 1
      %p184 = por %p182, %p183
      %p186 = scmp.ne.s32.totalorder %s171, %s185
      %p187 = scmp.eq.s32.totalorder %s30, 0
      %p188 = por %p186, %p187
      %s190 = sadd.s32 %s189, 1
      %p193 = scmp.eq.s32.totalorder %s24, 1
      %p194 = scmp.ne.s32.totalorder %s189, %s191
      %p195 = scmp.eq.s32.totalorder %s24, 0
      %p196 = por %p194, %p195
      %p197 = scmp.ne.s32.totalorder %s189, %s191
      %p198 = scmp.eq.s32.totalorder %s29, 1
      %p199 = por %p197, %p198
      %p200 = scmp.ne.s32.totalorder %s191, %s192
      %p201 = scmp.eq.s32.totalorder %s29, 0
      %p202 = por %p200, %p201
      %p203 = scmp.ne.s32.totalorder %s191, %s192
      %p204 = scmp.eq.s32.totalorder %s30, 1
      %p205 = por %p203, %p204
      %p207 = scmp.ne.s32.totalorder %s192, %s206
      %p208 = scmp.eq.s32.totalorder %s30, 0
      %p209 = por %p207, %p208
      %s210 = ssub.s32 %s24, %s31
      %p211 = scmp.eq.s32.totalorder %s210, 0
      %s213 = sadd.s32 %s212, 1
      %s214 = scalar_select %p211, %s212, %s213
      %p217 = pneg %p211
      %p218 = scmp.eq.s32.totalorder %s24, 1
      %p219 = por %p217, %p218
      %p220 = scmp.ne.s32.totalorder %s212, %s215
      %p221 = scmp.eq.s32.totalorder %s24, 0
      %p222 = por %p220, %p221
      %p223 = scmp.ne.s32.totalorder %s212, %s215
      %p224 = scmp.eq.s32.totalorder %s29, 1
      %p225 = por %p223, %p224
      %p226 = scmp.ne.s32.totalorder %s215, %s216
      %p227 = scmp.eq.s32.totalorder %s29, 0
      %p228 = por %p226, %p227
      %p229 = scmp.ne.s32.totalorder %s215, %s216
      %p230 = scmp.eq.s32.totalorder %s30, 1
      %p231 = por %p229, %p230
      %p233 = scmp.ne.s32.totalorder %s216, %s232
      %p234 = scmp.eq.s32.totalorder %s30, 0
      %p235 = por %p233, %p234
      %p236 = scmp.le.s32.totalorder 1, %s24
      %p237 = scmp.lt.s32.totalorder %s24, 3
      %p238 = pnand %p236, %p237
      %p239 = pneg %p238
      // Predicated region
      $region9: #{tpu_custom_call.1} parent=5 // pred_check
        _
      $region10: #{tpu_custom_call.1} parent=5 // pred_check_branch
        %241 = sbr.rel (%p238) target = $region12
      $region11: #{tpu_custom_call.1} parent=5 // pred_region
        %s242 = ssub.s32 %s24, 1
        // Predicated region
        $region13: #{tpu_custom_call.1} parent=11 // pred_check
          %p243 = pneg %p97
        $region14: #{tpu_custom_call.1} parent=11 // pred_check_branch
          %245 = sbr.rel (%p243) target = $region16
        $region15: #{tpu_custom_call.1} parent=11 // pred_region
          _
        $region16: #{tpu_custom_call.1} parent=11 // pred_fallthru
          _
        // Predicated region
        $region17: #{tpu_custom_call.1} parent=11 // pred_check
          %p246 = pneg %p118
        $region18: #{tpu_custom_call.1} parent=11 // pred_check_branch
          %248 = sbr.rel (%p246) target = $region20
        $region19: #{tpu_custom_call.1} parent=11 // pred_region
          _
        $region20: #{tpu_custom_call.1} parent=11 // pred_fallthru
          _
        // Predicated region
        $region21: #{tpu_custom_call.1} parent=11 // pred_check
          %p249 = pneg %p139
        $region22: #{tpu_custom_call.1} parent=11 // pred_check_branch
          %251 = sbr.rel (%p249) target = $region24
        $region23: #{tpu_custom_call.1} parent=11 // pred_region
          %s253 = ssub.s32 1024, 1024
          %254 = vsyncadd [#allocation6], %s253
          %s255 = sshll.u32 [#allocation7], 4
          %s256 = int_to_ptr.vmem [resolvable:$true] %s255
          %261 = dma.hbm_to_vmem [thread:$0]  %s4, 1024, %s256, [#allocation6], 64, 64, 4
        $region24: #{tpu_custom_call.1} parent=11 // pred_fallthru
          _
        // Predicated region
        $region25: #{tpu_custom_call.1} parent=11 // pred_check
          %p262 = pneg %p160
        $region26: #{tpu_custom_call.1} parent=11 // pred_check_branch
          %264 = sbr.rel (%p262) target = $region28
        $region27: #{tpu_custom_call.1} parent=11 // pred_region
          _
        $region28: #{tpu_custom_call.1} parent=11 // pred_fallthru
          _
        // Predicated region
        $region29: #{tpu_custom_call.1} parent=11 // pred_check
          %p265 = pneg %p181
        $region30: #{tpu_custom_call.1} parent=11 // pred_check_branch
          %267 = sbr.rel (%p265) target = $region32
        $region31: #{tpu_custom_call.1} parent=11 // pred_region
          %s269 = ssub.s32 1024, 1024
          %270 = vsyncadd [#allocation9], %s269
          %s271 = sshll.u32 [#allocation8], 4
          %s272 = int_to_ptr.vmem [resolvable:$true] %s271
          %277 = dma.hbm_to_vmem [thread:$0]  %s6, 1024, %s272, [#allocation9], 64, 64, 4
        $region32: #{tpu_custom_call.1} parent=11 // pred_fallthru
          _
        // Predicated region
        $region33: #{tpu_custom_call.1} parent=11 // pred_check
          %p278 = pneg %p202
        $region34: #{tpu_custom_call.1} parent=11 // pred_check_branch
          %280 = sbr.rel (%p278) target = $region36
        $region35: #{tpu_custom_call.1} parent=11 // pred_region
          _
        $region36: #{tpu_custom_call.1} parent=11 // pred_fallthru
          _
      $region12: #{tpu_custom_call.1} parent=5 // pred_fallthru
        _
      %p281 = scmp.lt.s32.totalorder %s24, 2
      // Predicated region
      $region37: #{tpu_custom_call.1} parent=5 // pred_check
        %p282 = pneg %p281
      $region38: #{tpu_custom_call.1} parent=5 // pred_check_branch
        %284 = sbr.rel (%p282) target = $region40
      $region39: #{tpu_custom_call.1} parent=5 // pred_region
        // Predicated region
        $region41: #{tpu_custom_call.1} parent=39 // pred_check
          %p285 = pneg %p44
        $region42: #{tpu_custom_call.1} parent=39 // pred_check_branch
          %287 = sbr.rel (%p285) target = $region44
        $region43: #{tpu_custom_call.1} parent=39 // pred_region
          %s288 = sand.u32 %s34, 1
          %s289 = scalar_lea.sflag [#allocation3], %s288
          %s290 = sand.u32 %s34, 1
          %s291 = smul.addr %s290, 8
          %s292 = scalar_lea.vmem [#allocation2], %s291
          %s294 = ssub.s32 128, 128
          %295 = vsyncadd %s289, %s294
          %s296 = smul.addr %s24, 128
          %s297 = scalar_lea.hbm %s0, %s296
          %s299 = sshll.u32 %s292, 4
          %s300 = int_to_ptr.vmem [resolvable:$true] %s299
          %302 = dma.hbm_to_vmem [thread:$0]  %s297, 128, %s300, %s289
        $region44: #{tpu_custom_call.1} parent=39 // pred_fallthru
          _
        // Predicated region
        $region45: #{tpu_custom_call.1} parent=39 // pred_check
          %p303 = pneg %p70
        $region46: #{tpu_custom_call.1} parent=39 // pred_check_branch
          %305 = sbr.rel (%p303) target = $region48
        $region47: #{tpu_custom_call.1} parent=39 // pred_region
          %s306 = sand.u32 %s24, 1
          %s307 = scalar_lea.sflag [#allocation6], %s306
          %s308 = sand.u32 %s60, 1
          %s309 = smul.addr %s308, 8
          %s310 = scalar_lea.vmem [#allocation5], %s309
          %s312 = ssub.s32 128, 128
          %313 = vsyncadd %s307, %s312
          %s314 = smul.addr %s24, 64
          %s315 = scalar_lea.hbm %s1, %s314
          %s316 = sshll.u32 %s310, 4
          %s317 = int_to_ptr.vmem [resolvable:$true] %s316
          %322 = dma.hbm_to_vmem [thread:$0]  %s315, 128, %s317, %s307, 128, 64, 4
        $region48: #{tpu_custom_call.1} parent=39 // pred_fallthru
          _
      $region40: #{tpu_custom_call.1} parent=5 // pred_fallthru
        _
      %p323 = scmp.le.s32.totalorder 1, %s24
      %p324 = scmp.lt.s32.totalorder %s24, 3
      %p325 = pnand %p323, %p324
      %p326 = pneg %p325
      // Predicated region
      $region49: #{tpu_custom_call.1} parent=5 // pred_check
        _
      $region50: #{tpu_custom_call.1} parent=5 // pred_check_branch
        %328 = sbr.rel (%p325) target = $region52
      $region51: #{tpu_custom_call.1} parent=5 // pred_region
        %s329 = ssub.s32 %s24, 1
        %s330 = sand.u32 %s37, 1
        %s331 = scalar_lea.sflag [#allocation3], %s330
        %s332 = sand.u32 %s37, 1
        %s333 = smul.addr %s332, 8
        %s334 = scalar_lea.vmem [#allocation2], %s333
        // Predicated region
        $region53: #{tpu_custom_call.1} parent=51 // pred_check
          %p335 = pneg %p50
        $region54: #{tpu_custom_call.1} parent=51 // pred_check_branch
          %337 = sbr.rel (%p335) target = $region56
        $region55: #{tpu_custom_call.1} parent=51 // pred_region
          %338 = dma.done %s331, 128
        $region56: #{tpu_custom_call.1} parent=51 // pred_fallthru
          _
        %s339 = sand.u32 %s29, 1
        %s340 = scalar_lea.sflag [#allocation6], %s339
        %s341 = sand.u32 %s63, 1
        %s342 = smul.addr %s341, 8
        %s343 = scalar_lea.vmem [#allocation5], %s342
        // Predicated region
        $region57: #{tpu_custom_call.1} parent=51 // pred_check
          %p344 = pneg %p76
        $region58: #{tpu_custom_call.1} parent=51 // pred_check_branch
          %346 = sbr.rel (%p344) target = $region60
        $region59: #{tpu_custom_call.1} parent=51 // pred_region
          %347 = dma.done %s340, 128
        $region60: #{tpu_custom_call.1} parent=51 // pred_fallthru
          _
        // Predicated region
        $region61: #{tpu_custom_call.1} parent=51 // pred_check
          %p348 = pneg %p139
        $region62: #{tpu_custom_call.1} parent=51 // pred_check_branch
          %350 = sbr.rel (%p348) target = $region64
        $region63: #{tpu_custom_call.1} parent=51 // pred_region
          %351 = dma.done [#allocation6], 1024
        $region64: #{tpu_custom_call.1} parent=51 // pred_fallthru
          _
        // Predicated region
        $region65: #{tpu_custom_call.1} parent=51 // pred_check
          %p352 = pneg %p181
        $region66: #{tpu_custom_call.1} parent=51 // pred_check_branch
          %354 = sbr.rel (%p352) target = $region68
        $region67: #{tpu_custom_call.1} parent=51 // pred_region
          %355 = dma.done [#allocation9], 1024
        $region68: #{tpu_custom_call.1} parent=51 // pred_fallthru
          _
        %s356 = sand.u32 %s37, 1
        %s357 = scalar_lea.sflag [#allocation3], %s356
        %s358 = sand.u32 %s37, 1
        %s359 = smul.addr %s358, 8
        %s360 = scalar_lea.vmem [#allocation2], %s359
        %p361 = pneg %p50
        %p362 = pneg %p47
        %s363 = sand.u32 %s29, 1
        %s364 = scalar_lea.sflag [#allocation6], %s363
        %s365 = sand.u32 %s63, 1
        %s366 = smul.addr %s365, 8
        %s367 = scalar_lea.vmem [#allocation5], %s366
        %p368 = pneg %p76
        %p369 = pneg %p73
        %p370 = pneg %p97
        %p371 = pneg %p94
        %p372 = pneg %p118
        %p373 = pneg %p115
        %p374 = pneg %p139
        %p375 = pneg %p136
        %p376 = pneg %p160
        %p377 = pneg %p157
        %p378 = pneg %p181
        %p379 = pneg %p178
        %p380 = pneg %p202
        %p381 = pneg %p199
        %p382 = pneg %p228
        %p383 = pneg %p225
        %s384 = sand.u32 %s215, 1
        %s385 = scalar_lea.sflag [#allocation4], %s384
        %s386 = sand.u32 %s215, 1
        %s387 = smul.addr %s386, 8
        %s388 = scalar_lea.vmem [#allocation10], %s387
        %v390 = vld [vmem:[%s334] sm:$0xff]
        %v391 = vpack.c.bf16 %v390, %v390
        %v392 = vld [vmem:[%s2] sm:$0xf]
        %v393 = vld [vmem:[%s3] sm:$0xf]
        %v394 = vld [vmem:[%s343] sm:$0xf]
        %v395 = vld [vmem:[%s343 + $0x4] sm:$0xf]
        %v398 = vunpack.c.l.b16 %v394
        %v399 = vunpack.c.l.b16 %v395
        %v400 = vpack.c.b16 %v399, %v398
        %vm402 = vcmask 130048
        %v404 = vsel %vm402, %v393, 0
        %406 = vmatprep.subr.bf16.mxu0 0
        %407 = vmatpush1.bf16.msra.mxu0 %v400
        %408 = vmatprep.subr.bf16.mxu0 0
        %409 = vmatpush1.bf16.msra.mxu0 0
        %410 = vmatprep.subr.bf16.mxu0 0
        %411 = vmatpush1.bf16.msra.mxu0 0
        %412 = vmatprep.subr.bf16.mxu0 0
        %413 = vmatpush1.bf16.msra.mxu0 0
        %414 = vmatprep.subr.bf16.mxu0 0
        %415 = vmatpush1.bf16.msra.mxu0 0
        %416 = vmatprep.subr.bf16.mxu0 0
        %417 = vmatpush1.bf16.msra.mxu0 0
        %418 = vmatprep.subr.bf16.mxu0 0
        %419 = vmatpush1.bf16.msra.mxu0 0
        %420 = vmatprep.subr.bf16.mxu0 0
        %421 = vmatpush1.bf16.msra.mxu0 0
        %422 = vmatprep.subr.bf16.mxu0 0
        %423 = vmatpush1.bf16.msra.mxu0 0
        %424 = vmatprep.subr.bf16.mxu0 0
        %425 = vmatpush1.bf16.msra.mxu0 0
        %426 = vmatprep.subr.bf16.mxu0 0
        %427 = vmatpush1.bf16.msra.mxu0 0
        %428 = vmatprep.subr.bf16.mxu0 0
        %429 = vmatpush1.bf16.msra.mxu0 0
        %430 = vmatprep.subr.bf16.mxu0 0
        %431 = vmatpush1.bf16.msra.mxu0 0
        %432 = vmatprep.subr.bf16.mxu0 0
        %433 = vmatpush1.bf16.msra.mxu0 0
        %434 = vmatprep.subr.bf16.mxu0 0
        %435 = vmatpush1.bf16.msra.mxu0 0
        %436 = vmatprep.subr.bf16.mxu0 0
        %437 = vmatpush1.bf16.msra.mxu0 0
        %438 = vmatprep.mubr.bf16.mxu0 0
        %439 = vmatmul.mubr.bf16.gmra.mrb[0].mxu0 %v404
        %v440 = vpop.f32.mrb[0].mxu0
        %v441 = vadd.f32 0.0, %v440
        %v442 = vpop.f32.mrb[0].mxu0
        %v443 = vpop.f32.mrb[0].mxu0
        %v444 = vpop.f32.mrb[0].mxu0
        %445 = vdwg.mxu0
        %vm446 = vcmask 64512
        %v448 = vsel %vm446, %v392, 0
        %vm450 = vcmask 1043456
        %v452 = vsel %vm450, %v391, 0
        %454 = vmatprep.subr.bf16.mxu0 0
        %455 = vmatpush1.bf16.msra.mxu0 %v452
        %456 = vmatprep.subr.bf16.mxu0 0
        %457 = vmatpush1.bf16.msra.mxu0 0
        %458 = vmatprep.subr.bf16.mxu0 0
        %459 = vmatpush1.bf16.msra.mxu0 0
        %460 = vmatprep.subr.bf16.mxu0 0
        %461 = vmatpush1.bf16.msra.mxu0 0
        %462 = vmatprep.subr.bf16.mxu0 0
        %463 = vmatpush1.bf16.msra.mxu0 0
        %464 = vmatprep.subr.bf16.mxu0 0
        %465 = vmatpush1.bf16.msra.mxu0 0
        %466 = vmatprep.subr.bf16.mxu0 0
        %467 = vmatpush1.bf16.msra.mxu0 0
        %468 = vmatprep.subr.bf16.mxu0 0
        %469 = vmatpush1.bf16.msra.mxu0 0
        %470 = vmatprep.subr.bf16.mxu0 0
        %471 = vmatpush1.bf16.msra.mxu0 0
        %472 = vmatprep.subr.bf16.mxu0 0
        %473 = vmatpush1.bf16.msra.mxu0 0
        %474 = vmatprep.subr.bf16.mxu0 0
        %475 = vmatpush1.bf16.msra.mxu0 0
        %476 = vmatprep.subr.bf16.mxu0 0
        %477 = vmatpush1.bf16.msra.mxu0 0
        %478 = vmatprep.subr.bf16.mxu0 0
        %479 = vmatpush1.bf16.msra.mxu0 0
        %480 = vmatprep.subr.bf16.mxu0 0
        %481 = vmatpush1.bf16.msra.mxu0 0
        %482 = vmatprep.subr.bf16.mxu0 0
        %483 = vmatpush1.bf16.msra.mxu0 0
        %484 = vmatprep.subr.bf16.mxu0 0
        %485 = vmatpush1.bf16.msra.mxu0 0
        %486 = vmatprep.mubr.bf16.mxu0 0
        %487 = vmatmul.mubr.bf16.gmra.mrb[0].mxu0 %v448
        %v488 = vpop.f32.mrb[0].mxu0
        %v489 = vadd.f32 %v441, %v488
        %v490 = vpop.f32.mrb[0].mxu0
        %v491 = vpop.f32.mrb[0].mxu0
        %v492 = vpop.f32.mrb[0].mxu0
        %493 = vdwg.mxu0
        %v494 = vmul.f32 %v390, 0.1
        %v495 = vadd.f32 %v489, %v494
        %v496 = vpack.c.bf16 %v495, %v495
        %v497 = vld [vmem:[#allocation7] sm:$0xf]
        %v498 = vld [vmem:[#allocation7 + $0x4] sm:$0xf]
        %v499 = vld [vmem:[#allocation7 + $0x8] sm:$0xf]
        %v500 = vld [vmem:[#allocation7 + $0xc] sm:$0xf]
        %v501 = vld [vmem:[#allocation7 + $0x10] sm:$0xf]
        %v502 = vld [vmem:[#allocation7 + $0x14] sm:$0xf]
        %v503 = vld [vmem:[#allocation7 + $0x18] sm:$0xf]
        %v504 = vld [vmem:[#allocation7 + $0x1c] sm:$0xf]
        %v505 = vld [vmem:[#allocation7 + $0x20] sm:$0xf]
        %v506 = vld [vmem:[#allocation7 + $0x24] sm:$0xf]
        %v507 = vld [vmem:[#allocation7 + $0x28] sm:$0xf]
        %v508 = vld [vmem:[#allocation7 + $0x2c] sm:$0xf]
        %v509 = vld [vmem:[#allocation7 + $0x30] sm:$0xf]
        %v510 = vld [vmem:[#allocation7 + $0x34] sm:$0xf]
        %v511 = vld [vmem:[#allocation7 + $0x38] sm:$0xf]
        %v512 = vld [vmem:[#allocation7 + $0x3c] sm:$0xf]
        %v513 = vld [vmem:[%s5] sm:$0x1]
        %v515 = vlaneseq
        %v516 = vshrl.u32 %v515, 7
        %v517 = vsub.s32 0, %v516
        %v518 = vrot.slane %v513, %v517
        %v536 = vunpack.c.l.b16 %v497
        %v537 = vunpack.c.l.b16 %v498
        %v538 = vunpack.c.l.b16 %v499
        %v539 = vunpack.c.l.b16 %v500
        %v540 = vunpack.c.l.b16 %v501
        %v541 = vunpack.c.l.b16 %v502
        %v542 = vunpack.c.l.b16 %v503
        %v543 = vunpack.c.l.b16 %v504
        %v544 = vunpack.c.l.b16 %v505
        %v545 = vunpack.c.l.b16 %v506
        %v546 = vunpack.c.l.b16 %v507
        %v547 = vunpack.c.l.b16 %v508
        %v548 = vunpack.c.l.b16 %v509
        %v549 = vunpack.c.l.b16 %v510
        %v550 = vunpack.c.l.b16 %v511
        %v551 = vunpack.c.l.b16 %v512
        %v552 = vpack.c.b16 %v537, %v536
        %v553 = vpack.c.b16 %v539, %v538
        %v554 = vpack.c.b16 %v541, %v540
        %v555 = vpack.c.b16 %v543, %v542
        %v556 = vpack.c.b16 %v545, %v544
        %v557 = vpack.c.b16 %v547, %v546
        %v558 = vpack.c.b16 %v549, %v548
        %v559 = vpack.c.b16 %v551, %v550
        %568 = vmatprep.subr.bf16.mxu0 0
        %569 = vmatpush1.bf16.msra.mxu0 %v552
        %570 = vmatprep.subr.bf16.mxu0 0
        %571 = vmatpush1.bf16.msra.mxu0 %v553
        %572 = vmatprep.subr.bf16.mxu0 0
        %573 = vmatpush1.bf16.msra.mxu0 %v554
        %574 = vmatprep.subr.bf16.mxu0 0
        %575 = vmatpush1.bf16.msra.mxu0 %v555
        %576 = vmatprep.subr.bf16.mxu0 0
        %577 = vmatpush1.bf16.msra.mxu0 %v556
        %578 = vmatprep.subr.bf16.mxu0 0
        %579 = vmatpush1.bf16.msra.mxu0 %v557
        %580 = vmatprep.subr.bf16.mxu0 0
        %581 = vmatpush1.bf16.msra.mxu0 %v558
        %582 = vmatprep.subr.bf16.mxu0 0
        %583 = vmatpush1.bf16.msra.mxu0 %v559
        %584 = vmatprep.subr.bf16.mxu0 0
        %585 = vmatpush1.bf16.msra.mxu0 0
        %586 = vmatprep.subr.bf16.mxu0 0
        %587 = vmatpush1.bf16.msra.mxu0 0
        %588 = vmatprep.subr.bf16.mxu0 0
        %589 = vmatpush1.bf16.msra.mxu0 0
        %590 = vmatprep.subr.bf16.mxu0 0
        %591 = vmatpush1.bf16.msra.mxu0 0
        %592 = vmatprep.subr.bf16.mxu0 0
        %593 = vmatpush1.bf16.msra.mxu0 0
        %594 = vmatprep.subr.bf16.mxu0 0
        %595 = vmatpush1.bf16.msra.mxu0 0
        %596 = vmatprep.subr.bf16.mxu0 0
        %597 = vmatpush1.bf16.msra.mxu0 0
        %598 = vmatprep.subr.bf16.mxu0 0
        %599 = vmatpush1.bf16.msra.mxu0 0
        %600 = vmatprep.mubr.bf16.mxu0 0
        %601 = vmatmul.mubr.bf16.gmra.mrb[0].mxu0 %v496
        %v602 = vpop.f32.mrb[0].mxu0
        %v603 = vadd.f32 %v518, %v602
        %v604 = vpop.f32.mrb[0].mxu0
        %v605 = vpop.f32.mrb[0].mxu0
        %v606 = vpop.f32.mrb[0].mxu0
        %607 = vdwg.mxu0
        %v608 = vmax.f32 %v603, 0.0
        %v609 = vpack.c.bf16 %v608, %v608
        %v610 = vld [vmem:[#allocation8] sm:$0xf]
        %v611 = vld [vmem:[#allocation8 + $0x4] sm:$0xf]
        %v612 = vld [vmem:[#allocation8 + $0x8] sm:$0xf]
        %v613 = vld [vmem:[#allocation8 + $0xc] sm:$0xf]
        %v614 = vld [vmem:[#allocation8 + $0x10] sm:$0xf]
        %v615 = vld [vmem:[#allocation8 + $0x14] sm:$0xf]
        %v616 = vld [vmem:[#allocation8 + $0x18] sm:$0xf]
        %v617 = vld [vmem:[#allocation8 + $0x1c] sm:$0xf]
        %v618 = vld [vmem:[#allocation8 + $0x20] sm:$0xf]
        %v619 = vld [vmem:[#allocation8 + $0x24] sm:$0xf]
        %v620 = vld [vmem:[#allocation8 + $0x28] sm:$0xf]
        %v621 = vld [vmem:[#allocation8 + $0x2c] sm:$0xf]
        %v622 = vld [vmem:[#allocation8 + $0x30] sm:$0xf]
        %v623 = vld [vmem:[#allocation8 + $0x34] sm:$0xf]
        %v624 = vld [vmem:[#allocation8 + $0x38] sm:$0xf]
        %v625 = vld [vmem:[#allocation8 + $0x3c] sm:$0xf]
        %v626 = vld [vmem:[%s7] sm:$0x1]
        %v628 = vlaneseq
        %v629 = vshrl.u32 %v628, 7
        %v630 = vsub.s32 0, %v629
        %v631 = vrot.slane %v626, %v630
        %v649 = vunpack.c.l.b16 %v610
        %v650 = vunpack.c.l.b16 %v611
        %v651 = vunpack.c.l.b16 %v612
        %v652 = vunpack.c.l.b16 %v613
        %v653 = vunpack.c.l.b16 %v614
        %v654 = vunpack.c.l.b16 %v615
        %v655 = vunpack.c.l.b16 %v616
        %v656 = vunpack.c.l.b16 %v617
        %v657 = vunpack.c.l.b16 %v618
        %v658 = vunpack.c.l.b16 %v619
        %v659 = vunpack.c.l.b16 %v620
        %v660 = vunpack.c.l.b16 %v621
        %v661 = vunpack.c.l.b16 %v622
        %v662 = vunpack.c.l.b16 %v623
        %v663 = vunpack.c.l.b16 %v624
        %v664 = vunpack.c.l.b16 %v625
        %v665 = vpack.c.b16 %v650, %v649
        %v666 = vpack.c.b16 %v652, %v651
        %v667 = vpack.c.b16 %v654, %v653
        %v668 = vpack.c.b16 %v656, %v655
        %v669 = vpack.c.b16 %v658, %v657
        %v670 = vpack.c.b16 %v660, %v659
        %v671 = vpack.c.b16 %v662, %v661
        %v672 = vpack.c.b16 %v664, %v663
        %681 = vmatprep.subr.bf16.mxu0 0
        %682 = vmatpush1.bf16.msra.mxu0 %v665
        %683 = vmatprep.subr.bf16.mxu0 0
        %684 = vmatpush1.bf16.msra.mxu0 %v666
        %685 = vmatprep.subr.bf16.mxu0 0
        %686 = vmatpush1.bf16.msra.mxu0 %v667
        %687 = vmatprep.subr.bf16.mxu0 0
        %688 = vmatpush1.bf16.msra.mxu0 %v668
        %689 = vmatprep.subr.bf16.mxu0 0
        %690 = vmatpush1.bf16.msra.mxu0 %v669
        %691 = vmatprep.subr.bf16.mxu0 0
        %692 = vmatpush1.bf16.msra.mxu0 %v670
        %693 = vmatprep.subr.bf16.mxu0 0
        %694 = vmatpush1.bf16.msra.mxu0 %v671
        %695 = vmatprep.subr.bf16.mxu0 0
        %696 = vmatpush1.bf16.msra.mxu0 %v672
        %697 = vmatprep.subr.bf16.mxu0 0
        %698 = vmatpush1.bf16.msra.mxu0 0
        %699 = vmatprep.subr.bf16.mxu0 0
        %700 = vmatpush1.bf16.msra.mxu0 0
        %701 = vmatprep.subr.bf16.mxu0 0
        %702 = vmatpush1.bf16.msra.mxu0 0
        %703 = vmatprep.subr.bf16.mxu0 0
        %704 = vmatpush1.bf16.msra.mxu0 0
        %705 = vmatprep.subr.bf16.mxu0 0
        %706 = vmatpush1.bf16.msra.mxu0 0
        %707 = vmatprep.subr.bf16.mxu0 0
        %708 = vmatpush1.bf16.msra.mxu0 0
        %709 = vmatprep.subr.bf16.mxu0 0
        %710 = vmatpush1.bf16.msra.mxu0 0
        %711 = vmatprep.subr.bf16.mxu0 0
        %712 = vmatpush1.bf16.msra.mxu0 0
        %713 = vmatprep.mubr.bf16.mxu0 0
        %714 = vmatmul.mubr.bf16.gmra.mrb[0].mxu0 %v609
        %v715 = vpop.f32.mrb[0].mxu0
        %v716 = vadd.f32 %v631, %v715
        %v717 = vpop.f32.mrb[0].mxu0
        %v718 = vpop.f32.mrb[0].mxu0
        %v719 = vpop.f32.mrb[0].mxu0
        %720 = vdwg.mxu0
        %721 = vst [vmem:[%s388] sm:$0xff] %v716
        %s722 = sand.u32 %s215, 1
        %s723 = scalar_lea.sflag [#allocation4], %s722
        %s724 = sand.u32 %s215, 1
        %s725 = smul.addr %s724, 8
        %s726 = scalar_lea.vmem [#allocation10], %s725
        // Predicated region
        $region69: #{tpu_custom_call.1} parent=51 // pred_check
          %p727 = pneg %p225
        $region70: #{tpu_custom_call.1} parent=51 // pred_check_branch
          %729 = sbr.rel (%p727) target = $region72
        $region71: #{tpu_custom_call.1} parent=51 // pred_region
          %s731 = ssub.s32 128, 128
          %732 = vsyncadd %s723, %s731
          %s733 = smul.addr %s29, 128
          %s734 = scalar_lea.hbm %s8, %s733
          %s736 = sshll.u32 %s726, 4
          %s737 = int_to_ptr.vmem [resolvable:$true] %s736
          %739 = dma.vmem_to_hbm [thread:$0]  %s737, 128, %s734, %s723
        $region72: #{tpu_custom_call.1} parent=51 // pred_fallthru
          _
      $region52: #{tpu_custom_call.1} parent=5 // pred_fallthru
        _
      %p740 = scmp.le.s32.totalorder 2, %s24
      // Predicated region
      $region73: #{tpu_custom_call.1} parent=5 // pred_check
        %p741 = pneg %p740
      $region74: #{tpu_custom_call.1} parent=5 // pred_check_branch
        %743 = sbr.rel (%p741) target = $region76
      $region75: #{tpu_custom_call.1} parent=5 // pred_region
        %s744 = ssub.s32 %s24, 2
        // Predicated region
        $region77: #{tpu_custom_call.1} parent=75 // pred_check
          %p745 = pneg %p231
        $region78: #{tpu_custom_call.1} parent=75 // pred_check_branch
          %747 = sbr.rel (%p745) target = $region80
        $region79: #{tpu_custom_call.1} parent=75 // pred_region
          %s748 = sand.u32 %s216, 1
          %s749 = scalar_lea.sflag [#allocation4], %s748
          %s750 = sand.u32 %s216, 1
          %s751 = smul.addr %s750, 8
          %s752 = scalar_lea.vmem [#allocation10], %s751
          %753 = dma.done %s749, 128
        $region80: #{tpu_custom_call.1} parent=75 // pred_fallthru
          _
      $region76: #{tpu_custom_call.1} parent=5 // pred_fallthru
        _
    $region6: #{tpu_custom_call.1} parent=1 // loop_footer
      %s28 = sadd.s32 1, %s24
    $region7: #{tpu_custom_call.1} parent=1 // loop_footer_branch
      %23 = sbr.rel target = $region3
    $region8: #{tpu_custom_call.1} parent=1 // loop_exit
      _
    %754 = vsyncpa [#allocation3], 1
    %s755 = scalar_lea.sflag [#allocation3], 1
    %756 = vsyncpa %s755, 1
    %757 = vsyncpa [#allocation6], 1
    %s758 = scalar_lea.sflag [#allocation6], 1
    %759 = vsyncpa %s758, 1
    %760 = vsyncpa [#allocation9], 1
    %761 = vsyncpa [#allocation4], 1
    %s762 = scalar_lea.sflag [#allocation4], 1
    %763 = vsyncpa %s762, 1

</llo_original>
